<compile_context>
chip_gen: v6e
topology: v6e:2x2x1
jax: 0.10.0
libtpu: 0.0.40
codegen_flags: <defaults>
</compile_context>

<pallas_src>
import functools

import numpy as np
import jax
import jax.numpy as jnp
from jax.experimental import pallas as pl
from jax.experimental.pallas import tpu as pltpu


def _loss_kernel(include_corr, has_tran, batch, tb, w, cw, *refs):
    """Fused PROSPECT loss.

    refs = (params, pred_ref_blk, target_ref_blk[, pred_tran_blk, target_tran_blk], out)
    Spectra blocks have width `cw` (128-aligned when possible); rows past `batch` and
    columns past `w` are masked before the squared-difference reduction.
    out is a (1, 2) SMEM accumulator: [0,0] = parameter penalties, [0,1] = raw SSE sum.
    """
    if has_tran:
        params_ref, pref_ref, tref_ref, ptran_ref, ttran_ref, out_ref = refs
    else:
        params_ref, pref_ref, tref_ref, out_ref = refs
        ptran_ref = ttran_ref = None

    step = pl.program_id(0)

    # ---- clamp penalties + correlation terms: computed once, on the first batch tile ----
    @pl.when(step == 0)
    def _():
        p = params_ref[...].astype(jnp.float32)          # (6, S): N,cab,car,cant,water,lma
        relu = lambda v: jnp.maximum(v, jnp.float32(0.0))
        N, cab, car, cant, water, lma = (p[i:i + 1, :] for i in range(6))

        # Only scalar constants here (no captured constant arrays); unbounded rows simply
        # have no upper-bound term, exactly like the PyTorch module.
        loss0 = (jnp.sum(relu(1.0 - N)) + jnp.sum(relu(N - 2.5))
                 + jnp.sum(relu(-cab)) + jnp.sum(relu(-car)) + jnp.sum(relu(-cant))
                 + jnp.sum(relu(0.004 - water)) + jnp.sum(relu(water - 0.04))
                 + jnp.sum(relu(0.0015 - lma)) + jnp.sum(relu(lma - 0.04)))

        # `if len(promodel.car) > 8:` is a static (trace-time) condition.
        if include_corr:
            def corr(x, y, target_r):
                vx = x - jnp.mean(x)
                vy = y - jnp.mean(y)
                # rsqrt goes to the EUP (its own VLIW slot); when either variance is 0
                # the numerator is necessarily 0 -> 0 * inf = NaN -> caught below.
                cost = jnp.sum(vx * vy) * jax.lax.rsqrt(jnp.sum(vx * vx) * jnp.sum(vy * vy))
                cost = jnp.where(jnp.isnan(cost), jnp.float32(0.0), cost)
                return jnp.float32(target_r) - jnp.minimum(cost, jnp.float32(target_r))

            loss0 = loss0 + corr(car, cab, 0.9) + corr(water, lma, 0.6)

        out_ref[0, 0] = loss0
        out_ref[0, 1] = jnp.float32(0.0)

    # ---- sliced-SSE partial sum for this batch tile ----
    mask = None
    if (batch % tb) != 0:                                 # masked tail tile
        row = jax.lax.broadcasted_iota(jnp.int32, (tb, cw), 0)
        mask = (row + step * tb) < batch
    if cw != w:                                           # 128-aligned block > valid width
        col = jax.lax.broadcasted_iota(jnp.int32, (tb, cw), 1)
        cmask = col < w
        mask = cmask if mask is None else (mask & cmask)

    def sliced_sse(a_ref, b_ref):
        a = a_ref[...] if a_ref.shape[1] == cw else a_ref[:, :cw]
        b = b_ref[...] if b_ref.shape[1] == cw else b_ref[:, :cw]
        d = a.astype(jnp.float32) - b.astype(jnp.float32)
        if mask is not None:
            d = jnp.where(mask, d, jnp.float32(0.0))
        return jnp.sum(d * d)

    partial = sliced_sse(pref_ref, tref_ref)
    if has_tran:
        partial = partial + sliced_sse(ptran_ref, ttran_ref)

    out_ref[0, 1] += partial


def _physical_vmem_bytes():
    """Per-core VMEM capacity; conservative fallback when the query is unavailable."""
    try:
        return int(pltpu.get_tpu_info().vmem_capacity_bytes)
    except Exception:
        return 64 << 20          # v7x per-TC physical VMEM (the smallest generation)


def _choose_batch_tile(batch, block_row_bytes, sublane, budget_bytes):
    """Largest batch tile (multiple of `sublane`, <= batch) whose double-buffered VMEM
    footprint stays under `budget_bytes`.  Batches smaller than one sublane group use the
    full batch (block dim == array dim is always legal)."""
    if batch <= sublane:
        return batch
    max_rows = budget_bytes // max(2 * block_row_bytes, 1)
    tb = (min(max_rows, batch) // sublane) * sublane
    return max(tb, sublane)


def prospect_loss(params, pred_ref, target_ref, pred_tran=None, target_tran=None):
    """params: (6, n_samples) stacked as (N, cab, car, cant, water, lma)."""
    assert params.ndim == 2 and params.shape[0] == 6
    n_samples = params.shape[1]
    include_corr = n_samples > 8
    has_tran = (pred_tran is not None) and (target_tran is not None)

    batch, w_pred = pred_ref.shape
    batch_t, w_tgt = target_ref.shape
    assert batch == batch_t
    w = w_pred - 150
    assert w > 0 and w == w_tgt - 100, (
        "pred spectra must have exactly 50 more wavelength columns than target")
    if has_tran:
        assert pred_tran.shape == (batch, w_pred)
        assert target_tran.shape == (batch, w_tgt)

    spectra = [pred_ref, target_ref]
    if has_tran:
        spectra += [pred_tran, target_tran]

    # Shared 128-aligned block width: skips DMA of the unused trailing 150/100 columns and
    # keeps every vector load full-width.  Falls back to full-width blocks (+ in-kernel
    # slice) only when the aligned width would overrun the target array.
    wc_aligned = ((w + 127) // 128) * 128
    if wc_aligned <= w_tgt:
        bwp = bwt = cw = wc_aligned
    else:
        bwp, bwt, cw = w_pred, w_tgt, w
    block_widths = [bwp, bwt] + ([bwp, bwt] if has_tran else [])

    # Generation-aware, sublane-packed batch tiling with a masked tail tile.
    sublane = max(8, 32 // min(a.dtype.itemsize for a in spectra))
    block_row_bytes = sum(bw * a.dtype.itemsize for bw, a in zip(block_widths, spectra))
    phys_vmem = _physical_vmem_bytes()
    budget = phys_vmem // 3                     # ~42 MiB on v5e/v6e, ~21 MiB on v7x
    tb = _choose_batch_tile(batch, block_row_bytes, sublane, budget)
    num_tiles = pl.cdiv(batch, tb)

    inv_n = 1.0 / float(batch * w)              # nn.MSELoss(): mean over all sliced elems

    in_specs = [pl.BlockSpec((6, n_samples), lambda i: (0, 0))]            # params resident
    in_specs += [pl.BlockSpec((tb, bw), lambda i: (i, 0)) for bw in block_widths]
    out_spec = pl.BlockSpec(memory_space=pltpu.MemorySpace.SMEM)           # (1,2) accumulator

    footprint = 2 * tb * block_row_bytes + params.size * params.dtype.itemsize + (1 << 20)
    vmem_limit = int(min(max(2 * footprint, 16 << 20), (phys_vmem * 3) // 4))

    kernel = functools.partial(_loss_kernel, include_corr, has_tran, batch, tb, w, cw)

    out = pl.pallas_call(
        kernel,
        out_shape=jax.ShapeDtypeStruct((1, 2), jnp.float32),
        grid_spec=pltpu.PrefetchScalarGridSpec(
            num_scalar_prefetch=0,
            grid=(num_tiles,),
            in_specs=in_specs,
            out_specs=out_spec,
        ),
        compiler_params=pltpu.CompilerParams(
            dimension_semantics=("arbitrary",),   # batch axis is a reduction (accumulator)
            vmem_limit_bytes=vmem_limit,
        ),
    )(params, *spectra)

    # penalty + raw SSE scaled once (avoids per-tile rescale drift).
    return out[0, 0] + out[0, 1] * jnp.float32(inv_n)


def _loss_reference(params, pred_ref, target_ref, pred_tran=None, target_tran=None):
    """Pure-JAX reference mirroring the PyTorch module, for correctness checking."""
    def corr_loss(x, y, target_r):
        vx = x - jnp.mean(x)
        vy = y - jnp.mean(y)
        denom = jnp.sqrt(jnp.sum(vx * vx)) * jnp.sqrt(jnp.sum(vy * vy))
        cost = jnp.sum(vx * vy) / denom
        cost = jnp.where(jnp.isnan(cost), jnp.float32(0.0), cost)
        cost = jnp.minimum(cost, jnp.float32(target_r))
        return jnp.float32(target_r) - cost

    N, cab, car, cant, water, lma = [params[i] for i in range(6)]
    relu = lambda v: jnp.maximum(v, 0.0)
    loss = jnp.sum(relu(1.0 - N)) + jnp.sum(relu(N - 2.5))
    loss += jnp.sum(relu(-cab)) + jnp.sum(relu(-car)) + jnp.sum(relu(-cant))
    loss += jnp.sum(relu(0.004 - water)) + jnp.sum(relu(water - 0.04))
    loss += jnp.sum(relu(0.0015 - lma)) + jnp.sum(relu(lma - 0.04))
    if params.shape[1] > 8:
        loss += corr_loss(car, cab, 0.9)
        loss += corr_loss(water, lma, 0.6)
    d = pred_ref[:, :-150] - target_ref[:, :-100]
    loss += jnp.mean(d * d)
    if pred_tran is not None and target_tran is not None:
        dt = pred_tran[:, :-150] - target_tran[:, :-100]
        loss += jnp.mean(dt * dt)
    return loss


if __name__ == "__main__":
    key = jax.random.PRNGKey(0)
    ks = jax.random.split(key, 10)

    S = 16        # n_samples (> 8 so the correlation terms are active)
    B = 4         # batch of spectra
    W_PRED = 256  # predicted spectrum width
    W_TGT = 206   # target spectrum width (= W_PRED - 50 so the sliced MSE widths match)

    # Deterministic synthetic "promodel" parameters (some values violate the bounds
    # so the clamp penalties are non-trivially exercised).
    N_p   = jax.random.uniform(ks[0], (S,), minval=0.8,  maxval=3.0)
    cab   = jax.random.uniform(ks[1], (S,), minval=-5.0, maxval=80.0)
    car   = jax.random.uniform(ks[2], (S,), minval=-2.0, maxval=25.0)
    cant  = jax.random.uniform(ks[3], (S,), minval=-1.0, maxval=5.0)
    water = jax.random.uniform(ks[4], (S,), minval=0.0,  maxval=0.06)
    lma   = jax.random.uniform(ks[5], (S,), minval=0.0,  maxval=0.06)
    params = jnp.stack([N_p, cab, car, cant, water, lma]).astype(jnp.float32)

    pred_ref    = jax.random.uniform(ks[6], (B, W_PRED), dtype=jnp.float32)
    target_ref  = jax.random.uniform(ks[7], (B, W_TGT),  dtype=jnp.float32)
    pred_tran   = jax.random.uniform(ks[8], (B, W_PRED), dtype=jnp.float32)
    target_tran = jax.random.uniform(ks[9], (B, W_TGT),  dtype=jnp.float32)

    out = prospect_loss(params, pred_ref, target_ref, pred_tran, target_tran)
    out = jax.block_until_ready(out)

    ref = _loss_reference(params, pred_ref, target_ref, pred_tran, target_tran)
    assert np.allclose(np.asarray(out), np.asarray(ref), rtol=1e-4, atol=1e-5), (out, ref)

    print("KERNEL_OK")
</pallas_src>

<mosaic_0001>
module attributes {stable_mosaic.version = 11 : i64} {
  func.func @_loss_kernel(%arg0: i32, %arg1: memref<6x16xf32, #tpu.memory_space<vmem>>, %arg2: memref<4x128xf32, #tpu.memory_space<vmem>>, %arg3: memref<4x128xf32, #tpu.memory_space<vmem>>, %arg4: memref<4x128xf32, #tpu.memory_space<vmem>>, %arg5: memref<4x128xf32, #tpu.memory_space<vmem>>, %arg6: memref<1x2xf32, #tpu.memory_space<smem>>) attributes {dimension_semantics = [#tpu.dimension_semantics<arbitrary>], iteration_bounds = array<i64: 1>, scalar_prefetch = 0 : i64, scratch_operands = 0 : i64, tpu.core_type = #tpu.core_type<tc>, window_params = [{pipeline_mode = #tpu.pipeline_mode<synchronous>, transform_indices = @transform_0, window_bounds = array<i64: 6, 16>}, {transform_indices = @transform_1, window_bounds = array<i64: 4, 128>}, {transform_indices = @transform_2, window_bounds = array<i64: 4, 128>}, {transform_indices = @transform_3, window_bounds = array<i64: 4, 128>}, {transform_indices = @transform_4, window_bounds = array<i64: 4, 128>}, {transform_indices = @transform_5, window_bounds = array<i64: 1, 2>}]} {
    %c0_i32 = arith.constant 0 : i32
    %0 = arith.cmpi eq, %arg0, %c0_i32 : i32
    %1 = arith.extui %0 : i1 to i32
    %c0_i32_0 = arith.constant 0 : i32
    %2 = arith.cmpi ne, %1, %c0_i32_0 : i32
    scf.if %2 {
      %c0_14 = arith.constant 0 : index
      %c0_15 = arith.constant 0 : index
      %30 = vector.load %arg1[%c0_14, %c0_15] : memref<6x16xf32, #tpu.memory_space<vmem>>, vector<6x16xf32>
      %31 = vector.extract_strided_slice %30 {offsets = [0, 0], sizes = [1, 16], strides = [1, 1]} : vector<6x16xf32> to vector<1x16xf32>
      %32 = vector.extract_strided_slice %30 {offsets = [1, 0], sizes = [1, 16], strides = [1, 1]} : vector<6x16xf32> to vector<1x16xf32>
      %33 = vector.extract_strided_slice %30 {offsets = [2, 0], sizes = [1, 16], strides = [1, 1]} : vector<6x16xf32> to vector<1x16xf32>
      %34 = vector.extract_strided_slice %30 {offsets = [3, 0], sizes = [1, 16], strides = [1, 1]} : vector<6x16xf32> to vector<1x16xf32>
      %35 = vector.extract_strided_slice %30 {offsets = [4, 0], sizes = [1, 16], strides = [1, 1]} : vector<6x16xf32> to vector<1x16xf32>
      %36 = vector.extract_strided_slice %30 {offsets = [5, 0], sizes = [1, 16], strides = [1, 1]} : vector<6x16xf32> to vector<1x16xf32>
      %cst_16 = arith.constant 1.000000e+00 : f32
      %37 = vector.broadcast %cst_16 : f32 to vector<1x16xf32>
      %38 = arith.subf %37, %31 : vector<1x16xf32>
      %cst_17 = arith.constant 0.000000e+00 : f32
      %39 = vector.broadcast %cst_17 : f32 to vector<1x16xf32>
      %40 = arith.maximumf %38, %39 : vector<1x16xf32>
      %41 = vector.shape_cast %40 : vector<1x16xf32> to vector<1x1x16xf32>
      %cst_18 = arith.constant dense<0.000000e+00> : vector<1xf32>
      %42 = vector.multi_reduction <add>, %41, %cst_18 [1, 2] : vector<1x1x16xf32> to vector<1xf32>
      %43 = vector.shape_cast %42 : vector<1xf32> to vector<1x1x1xf32>
      %44 = vector.extract %43[0, 0, 0] : f32 from vector<1x1x1xf32>
      %cst_19 = arith.constant 2.500000e+00 : f32
      %45 = vector.broadcast %cst_19 : f32 to vector<1x16xf32>
      %46 = arith.subf %31, %45 : vector<1x16xf32>
      %cst_20 = arith.constant 0.000000e+00 : f32
      %47 = vector.broadcast %cst_20 : f32 to vector<1x16xf32>
      %48 = arith.maximumf %46, %47 : vector<1x16xf32>
      %49 = vector.shape_cast %48 : vector<1x16xf32> to vector<1x1x16xf32>
      %cst_21 = arith.constant dense<0.000000e+00> : vector<1xf32>
      %50 = vector.multi_reduction <add>, %49, %cst_21 [1, 2] : vector<1x1x16xf32> to vector<1xf32>
      %51 = vector.shape_cast %50 : vector<1xf32> to vector<1x1x1xf32>
      %52 = vector.extract %51[0, 0, 0] : f32 from vector<1x1x1xf32>
      %53 = arith.addf %44, %52 : f32
      %cst_22 = arith.constant 0.000000e+00 : f32
      %54 = vector.broadcast %cst_22 : f32 to vector<1x16xf32>
      %55 = arith.subf %54, %32 : vector<1x16xf32>
      %cst_23 = arith.constant 0.000000e+00 : f32
      %56 = vector.broadcast %cst_23 : f32 to vector<1x16xf32>
      %57 = arith.maximumf %55, %56 : vector<1x16xf32>
      %58 = vector.shape_cast %57 : vector<1x16xf32> to vector<1x1x16xf32>
      %cst_24 = arith.constant dense<0.000000e+00> : vector<1xf32>
      %59 = vector.multi_reduction <add>, %58, %cst_24 [1, 2] : vector<1x1x16xf32> to vector<1xf32>
      %60 = vector.shape_cast %59 : vector<1xf32> to vector<1x1x1xf32>
      %61 = vector.extract %60[0, 0, 0] : f32 from vector<1x1x1xf32>
      %62 = arith.addf %53, %61 : f32
      %cst_25 = arith.constant 0.000000e+00 : f32
      %63 = vector.broadcast %cst_25 : f32 to vector<1x16xf32>
      %64 = arith.subf %63, %33 : vector<1x16xf32>
      %cst_26 = arith.constant 0.000000e+00 : f32
      %65 = vector.broadcast %cst_26 : f32 to vector<1x16xf32>
      %66 = arith.maximumf %64, %65 : vector<1x16xf32>
      %67 = vector.shape_cast %66 : vector<1x16xf32> to vector<1x1x16xf32>
      %cst_27 = arith.constant dense<0.000000e+00> : vector<1xf32>
      %68 = vector.multi_reduction <add>, %67, %cst_27 [1, 2] : vector<1x1x16xf32> to vector<1xf32>
      %69 = vector.shape_cast %68 : vector<1xf32> to vector<1x1x1xf32>
      %70 = vector.extract %69[0, 0, 0] : f32 from vector<1x1x1xf32>
      %71 = arith.addf %62, %70 : f32
      %cst_28 = arith.constant 0.000000e+00 : f32
      %72 = vector.broadcast %cst_28 : f32 to vector<1x16xf32>
      %73 = arith.subf %72, %34 : vector<1x16xf32>
      %cst_29 = arith.constant 0.000000e+00 : f32
      %74 = vector.broadcast %cst_29 : f32 to vector<1x16xf32>
      %75 = arith.maximumf %73, %74 : vector<1x16xf32>
      %76 = vector.shape_cast %75 : vector<1x16xf32> to vector<1x1x16xf32>
      %cst_30 = arith.constant dense<0.000000e+00> : vector<1xf32>
      %77 = vector.multi_reduction <add>, %76, %cst_30 [1, 2] : vector<1x1x16xf32> to vector<1xf32>
      %78 = vector.shape_cast %77 : vector<1xf32> to vector<1x1x1xf32>
      %79 = vector.extract %78[0, 0, 0] : f32 from vector<1x1x1xf32>
      %80 = arith.addf %71, %79 : f32
      %cst_31 = arith.constant 4.000000e-03 : f32
      %81 = vector.broadcast %cst_31 : f32 to vector<1x16xf32>
      %82 = arith.subf %81, %35 : vector<1x16xf32>
      %cst_32 = arith.constant 0.000000e+00 : f32
      %83 = vector.broadcast %cst_32 : f32 to vector<1x16xf32>
      %84 = arith.maximumf %82, %83 : vector<1x16xf32>
      %85 = vector.shape_cast %84 : vector<1x16xf32> to vector<1x1x16xf32>
      %cst_33 = arith.constant dense<0.000000e+00> : vector<1xf32>
      %86 = vector.multi_reduction <add>, %85, %cst_33 [1, 2] : vector<1x1x16xf32> to vector<1xf32>
      %87 = vector.shape_cast %86 : vector<1xf32> to vector<1x1x1xf32>
      %88 = vector.extract %87[0, 0, 0] : f32 from vector<1x1x1xf32>
      %89 = arith.addf %80, %88 : f32
      %cst_34 = arith.constant 4.000000e-02 : f32
      %90 = vector.broadcast %cst_34 : f32 to vector<1x16xf32>
      %91 = arith.subf %35, %90 : vector<1x16xf32>
      %cst_35 = arith.constant 0.000000e+00 : f32
      %92 = vector.broadcast %cst_35 : f32 to vector<1x16xf32>
      %93 = arith.maximumf %91, %92 : vector<1x16xf32>
      %94 = vector.shape_cast %93 : vector<1x16xf32> to vector<1x1x16xf32>
      %cst_36 = arith.constant dense<0.000000e+00> : vector<1xf32>
      %95 = vector.multi_reduction <add>, %94, %cst_36 [1, 2] : vector<1x1x16xf32> to vector<1xf32>
      %96 = vector.shape_cast %95 : vector<1xf32> to vector<1x1x1xf32>
      %97 = vector.extract %96[0, 0, 0] : f32 from vector<1x1x1xf32>
      %98 = arith.addf %89, %97 : f32
      %cst_37 = arith.constant 1.500000e-03 : f32
      %99 = vector.broadcast %cst_37 : f32 to vector<1x16xf32>
      %100 = arith.subf %99, %36 : vector<1x16xf32>
      %cst_38 = arith.constant 0.000000e+00 : f32
      %101 = vector.broadcast %cst_38 : f32 to vector<1x16xf32>
      %102 = arith.maximumf %100, %101 : vector<1x16xf32>
      %103 = vector.shape_cast %102 : vector<1x16xf32> to vector<1x1x16xf32>
      %cst_39 = arith.constant dense<0.000000e+00> : vector<1xf32>
      %104 = vector.multi_reduction <add>, %103, %cst_39 [1, 2] : vector<1x1x16xf32> to vector<1xf32>
      %105 = vector.shape_cast %104 : vector<1xf32> to vector<1x1x1xf32>
      %106 = vector.extract %105[0, 0, 0] : f32 from vector<1x1x1xf32>
      %107 = arith.addf %98, %106 : f32
      %cst_40 = arith.constant 4.000000e-02 : f32
      %108 = vector.broadcast %cst_40 : f32 to vector<1x16xf32>
      %109 = arith.subf %36, %108 : vector<1x16xf32>
      %cst_41 = arith.constant 0.000000e+00 : f32
      %110 = vector.broadcast %cst_41 : f32 to vector<1x16xf32>
      %111 = arith.maximumf %109, %110 : vector<1x16xf32>
      %112 = vector.shape_cast %111 : vector<1x16xf32> to vector<1x1x16xf32>
      %cst_42 = arith.constant dense<0.000000e+00> : vector<1xf32>
      %113 = vector.multi_reduction <add>, %112, %cst_42 [1, 2] : vector<1x1x16xf32> to vector<1xf32>
      %114 = vector.shape_cast %113 : vector<1xf32> to vector<1x1x1xf32>
      %115 = vector.extract %114[0, 0, 0] : f32 from vector<1x1x1xf32>
      %116 = arith.addf %107, %115 : f32
      %117 = vector.shape_cast %33 : vector<1x16xf32> to vector<1x1x16xf32>
      %cst_43 = arith.constant dense<0.000000e+00> : vector<1xf32>
      %118 = vector.multi_reduction <add>, %117, %cst_43 [1, 2] : vector<1x1x16xf32> to vector<1xf32>
      %119 = vector.shape_cast %118 : vector<1xf32> to vector<1x1x1xf32>
      %120 = vector.extract %119[0, 0, 0] : f32 from vector<1x1x1xf32>
      %cst_44 = arith.constant 1.600000e+01 : f32
      %121 = arith.divf %120, %cst_44 : f32
      %122 = vector.broadcast %121 : f32 to vector<1x16xf32>
      %123 = arith.subf %33, %122 : vector<1x16xf32>
      %124 = vector.shape_cast %32 : vector<1x16xf32> to vector<1x1x16xf32>
      %cst_45 = arith.constant dense<0.000000e+00> : vector<1xf32>
      %125 = vector.multi_reduction <add>, %124, %cst_45 [1, 2] : vector<1x1x16xf32> to vector<1xf32>
      %126 = vector.shape_cast %125 : vector<1xf32> to vector<1x1x1xf32>
      %127 = vector.extract %126[0, 0, 0] : f32 from vector<1x1x1xf32>
      %cst_46 = arith.constant 1.600000e+01 : f32
      %128 = arith.divf %127, %cst_46 : f32
      %129 = vector.broadcast %128 : f32 to vector<1x16xf32>
      %130 = arith.subf %32, %129 : vector<1x16xf32>
      %131 = arith.mulf %123, %130 : vector<1x16xf32>
      %132 = vector.shape_cast %131 : vector<1x16xf32> to vector<1x1x16xf32>
      %cst_47 = arith.constant dense<0.000000e+00> : vector<1xf32>
      %133 = vector.multi_reduction <add>, %132, %cst_47 [1, 2] : vector<1x1x16xf32> to vector<1xf32>
      %134 = vector.shape_cast %133 : vector<1xf32> to vector<1x1x1xf32>
      %135 = vector.extract %134[0, 0, 0] : f32 from vector<1x1x1xf32>
      %136 = arith.mulf %123, %123 : vector<1x16xf32>
      %137 = vector.shape_cast %136 : vector<1x16xf32> to vector<1x1x16xf32>
      %cst_48 = arith.constant dense<0.000000e+00> : vector<1xf32>
      %138 = vector.multi_reduction <add>, %137, %cst_48 [1, 2] : vector<1x1x16xf32> to vector<1xf32>
      %139 = vector.shape_cast %138 : vector<1xf32> to vector<1x1x1xf32>
      %140 = vector.extract %139[0, 0, 0] : f32 from vector<1x1x1xf32>
      %141 = arith.mulf %130, %130 : vector<1x16xf32>
      %142 = vector.shape_cast %141 : vector<1x16xf32> to vector<1x1x16xf32>
      %cst_49 = arith.constant dense<0.000000e+00> : vector<1xf32>
      %143 = vector.multi_reduction <add>, %142, %cst_49 [1, 2] : vector<1x1x16xf32> to vector<1xf32>
      %144 = vector.shape_cast %143 : vector<1xf32> to vector<1x1x1xf32>
      %145 = vector.extract %144[0, 0, 0] : f32 from vector<1x1x1xf32>
      %146 = arith.mulf %140, %145 : f32
      %147 = math.rsqrt %146 : f32
      %148 = arith.mulf %135, %147 : f32
      %149 = arith.cmpf one, %148, %148 : f32
      %cst_50 = arith.constant 0.000000e+00 : f32
      %150 = arith.select %149, %cst_50, %148 : f32
      %cst_51 = arith.constant 0.899999976 : f32
      %151 = arith.minimumf %150, %cst_51 : f32
      %cst_52 = arith.constant 0.899999976 : f32
      %152 = arith.subf %cst_52, %151 : f32
      %153 = arith.addf %116, %152 : f32
      %154 = vector.shape_cast %35 : vector<1x16xf32> to vector<1x1x16xf32>
      %cst_53 = arith.constant dense<0.000000e+00> : vector<1xf32>
      %155 = vector.multi_reduction <add>, %154, %cst_53 [1, 2] : vector<1x1x16xf32> to vector<1xf32>
      %156 = vector.shape_cast %155 : vector<1xf32> to vector<1x1x1xf32>
      %157 = vector.extract %156[0, 0, 0] : f32 from vector<1x1x1xf32>
      %cst_54 = arith.constant 1.600000e+01 : f32
      %158 = arith.divf %157, %cst_54 : f32
      %159 = vector.broadcast %158 : f32 to vector<1x16xf32>
      %160 = arith.subf %35, %159 : vector<1x16xf32>
      %161 = vector.shape_cast %36 : vector<1x16xf32> to vector<1x1x16xf32>
      %cst_55 = arith.constant dense<0.000000e+00> : vector<1xf32>
      %162 = vector.multi_reduction <add>, %161, %cst_55 [1, 2] : vector<1x1x16xf32> to vector<1xf32>
      %163 = vector.shape_cast %162 : vector<1xf32> to vector<1x1x1xf32>
      %164 = vector.extract %163[0, 0, 0] : f32 from vector<1x1x1xf32>
      %cst_56 = arith.constant 1.600000e+01 : f32
      %165 = arith.divf %164, %cst_56 : f32
      %166 = vector.broadcast %165 : f32 to vector<1x16xf32>
      %167 = arith.subf %36, %166 : vector<1x16xf32>
      %168 = arith.mulf %160, %167 : vector<1x16xf32>
      %169 = vector.shape_cast %168 : vector<1x16xf32> to vector<1x1x16xf32>
      %cst_57 = arith.constant dense<0.000000e+00> : vector<1xf32>
      %170 = vector.multi_reduction <add>, %169, %cst_57 [1, 2] : vector<1x1x16xf32> to vector<1xf32>
      %171 = vector.shape_cast %170 : vector<1xf32> to vector<1x1x1xf32>
      %172 = vector.extract %171[0, 0, 0] : f32 from vector<1x1x1xf32>
      %173 = arith.mulf %160, %160 : vector<1x16xf32>
      %174 = vector.shape_cast %173 : vector<1x16xf32> to vector<1x1x16xf32>
      %cst_58 = arith.constant dense<0.000000e+00> : vector<1xf32>
      %175 = vector.multi_reduction <add>, %174, %cst_58 [1, 2] : vector<1x1x16xf32> to vector<1xf32>
      %176 = vector.shape_cast %175 : vector<1xf32> to vector<1x1x1xf32>
      %177 = vector.extract %176[0, 0, 0] : f32 from vector<1x1x1xf32>
      %178 = arith.mulf %167, %167 : vector<1x16xf32>
      %179 = vector.shape_cast %178 : vector<1x16xf32> to vector<1x1x16xf32>
      %cst_59 = arith.constant dense<0.000000e+00> : vector<1xf32>
      %180 = vector.multi_reduction <add>, %179, %cst_59 [1, 2] : vector<1x1x16xf32> to vector<1xf32>
      %181 = vector.shape_cast %180 : vector<1xf32> to vector<1x1x1xf32>
      %182 = vector.extract %181[0, 0, 0] : f32 from vector<1x1x1xf32>
      %183 = arith.mulf %177, %182 : f32
      %184 = math.rsqrt %183 : f32
      %185 = arith.mulf %172, %184 : f32
      %186 = arith.cmpf one, %185, %185 : f32
      %cst_60 = arith.constant 0.000000e+00 : f32
      %187 = arith.select %186, %cst_60, %185 : f32
      %cst_61 = arith.constant 6.000000e-01 : f32
      %188 = arith.minimumf %187, %cst_61 : f32
      %cst_62 = arith.constant 6.000000e-01 : f32
      %189 = arith.subf %cst_62, %188 : f32
      %190 = arith.addf %153, %189 : f32
      %c0_63 = arith.constant 0 : index
      %c0_64 = arith.constant 0 : index
      %191 = memref.load %arg6[%c0_63, %c0_64] : memref<1x2xf32, #tpu.memory_space<smem>>
      memref.store %190, %arg6[%c0_63, %c0_64] : memref<1x2xf32, #tpu.memory_space<smem>>
      %cst_65 = arith.constant 0.000000e+00 : f32
      %c0_66 = arith.constant 0 : index
      %c1_67 = arith.constant 1 : index
      %192 = memref.load %arg6[%c0_66, %c1_67] : memref<1x2xf32, #tpu.memory_space<smem>>
      memref.store %cst_65, %arg6[%c0_66, %c1_67] : memref<1x2xf32, #tpu.memory_space<smem>>
    } else {
    }
    %3 = tpu.iota {dimensions = array<i32: 1>} : vector<4x128xi32>
    %c106_i32 = arith.constant 106 : i32
    %4 = vector.broadcast %c106_i32 : i32 to vector<4x128xi32>
    %5 = arith.cmpi slt, %3, %4 : vector<4x128xi32>
    %c0 = arith.constant 0 : index
    %c0_1 = arith.constant 0 : index
    %6 = vector.load %arg2[%c0, %c0_1] : memref<4x128xf32, #tpu.memory_space<vmem>>, vector<4x128xf32>
    %c0_2 = arith.constant 0 : index
    %c0_3 = arith.constant 0 : index
    %7 = vector.load %arg3[%c0_2, %c0_3] : memref<4x128xf32, #tpu.memory_space<vmem>>, vector<4x128xf32>
    %8 = arith.subf %6, %7 : vector<4x128xf32>
    %cst = arith.constant 0.000000e+00 : f32
    %9 = vector.broadcast %cst : f32 to vector<4x128xf32>
    %10 = arith.select %5, %8, %9 : vector<4x128xi1>, vector<4x128xf32>
    %11 = arith.mulf %10, %10 : vector<4x128xf32>
    %12 = vector.shape_cast %11 : vector<4x128xf32> to vector<1x4x128xf32>
    %cst_4 = arith.constant dense<0.000000e+00> : vector<1xf32>
    %13 = vector.multi_reduction <add>, %12, %cst_4 [1, 2] : vector<1x4x128xf32> to vector<1xf32>
    %14 = vector.shape_cast %13 : vector<1xf32> to vector<1x1x1xf32>
    %15 = vector.extract %14[0, 0, 0] : f32 from vector<1x1x1xf32>
    %c0_5 = arith.constant 0 : index
    %c0_6 = arith.constant 0 : index
    %16 = vector.load %arg4[%c0_5, %c0_6] : memref<4x128xf32, #tpu.memory_space<vmem>>, vector<4x128xf32>
    %c0_7 = arith.constant 0 : index
    %c0_8 = arith.constant 0 : index
    %17 = vector.load %arg5[%c0_7, %c0_8] : memref<4x128xf32, #tpu.memory_space<vmem>>, vector<4x128xf32>
    %18 = arith.subf %16, %17 : vector<4x128xf32>
    %cst_9 = arith.constant 0.000000e+00 : f32
    %19 = vector.broadcast %cst_9 : f32 to vector<4x128xf32>
    %20 = arith.select %5, %18, %19 : vector<4x128xi1>, vector<4x128xf32>
    %21 = arith.mulf %20, %20 : vector<4x128xf32>
    %22 = vector.shape_cast %21 : vector<4x128xf32> to vector<1x4x128xf32>
    %cst_10 = arith.constant dense<0.000000e+00> : vector<1xf32>
    %23 = vector.multi_reduction <add>, %22, %cst_10 [1, 2] : vector<1x4x128xf32> to vector<1xf32>
    %24 = vector.shape_cast %23 : vector<1xf32> to vector<1x1x1xf32>
    %25 = vector.extract %24[0, 0, 0] : f32 from vector<1x1x1xf32>
    %26 = arith.addf %15, %25 : f32
    %c0_11 = arith.constant 0 : index
    %c1 = arith.constant 1 : index
    %27 = memref.load %arg6[%c0_11, %c1] : memref<1x2xf32, #tpu.memory_space<smem>>
    %28 = arith.addf %27, %26 : f32
    %c0_12 = arith.constant 0 : index
    %c1_13 = arith.constant 1 : index
    %29 = memref.load %arg6[%c0_12, %c1_13] : memref<1x2xf32, #tpu.memory_space<smem>>
    memref.store %28, %arg6[%c0_12, %c1_13] : memref<1x2xf32, #tpu.memory_space<smem>>
    return
  }
  func.func @transform_0(%arg0: i32) -> (i32, i32) {
    %c0_i32 = arith.constant 0 : i32
    %c0_i32_0 = arith.constant 0 : i32
    %c0_i32_1 = arith.constant 0 : i32
    return %c0_i32, %c0_i32_0 : i32, i32
  }
  func.func @transform_1(%arg0: i32) -> (i32, i32) {
    %c0_i32 = arith.constant 0 : i32
    %c0_i32_0 = arith.constant 0 : i32
    return %arg0, %c0_i32 : i32, i32
  }
  func.func @transform_2(%arg0: i32) -> (i32, i32) {
    %c0_i32 = arith.constant 0 : i32
    %c0_i32_0 = arith.constant 0 : i32
    return %arg0, %c0_i32 : i32, i32
  }
  func.func @transform_3(%arg0: i32) -> (i32, i32) {
    %c0_i32 = arith.constant 0 : i32
    %c0_i32_0 = arith.constant 0 : i32
    return %arg0, %c0_i32 : i32, i32
  }
  func.func @transform_4(%arg0: i32) -> (i32, i32) {
    %c0_i32 = arith.constant 0 : i32
    %c0_i32_0 = arith.constant 0 : i32
    return %arg0, %c0_i32 : i32, i32
  }
  func.func @transform_5(%arg0: i32) -> (i32, i32) {
    %c0_i32 = arith.constant 0 : i32
    %c0_i32_0 = arith.constant 0 : i32
    %c0_i32_1 = arith.constant 0 : i32
    return %c0_i32, %c0_i32_0 : i32, i32
  }
}

</mosaic_0001>

<llo_original>
// kernel: tpu_custom_call.1
$region0: #{tpu_custom_call.1}
  #allocation0 [shape = 'u32[]', space=smem, size = 0x4, offset = 0x4, fixed_abs, tag = 'smem constant byte address 0x4 - core index']
  #allocation1 [shape = 'u32[144,128]{1,0:T(1,128)}', space=vmem, size = 0x12000, scoped, tag = 'internal scratch']
  %s0 = inlined_call_operand.hbm [shape: f32[6,16], index: 0, kind: input, shape index: {}]
  %s1 = inlined_call_operand.hbm [shape: f32[4,256], index: 1, kind: input, shape index: {}]
  %s2 = inlined_call_operand.hbm [shape: f32[4,206], index: 2, kind: input, shape index: {}]
  %s3 = inlined_call_operand.hbm [shape: f32[4,256], index: 3, kind: input, shape index: {}]
  %s4 = inlined_call_operand.hbm [shape: f32[4,206], index: 4, kind: input, shape index: {}]
  %s5 = inlined_call_operand.hbm [shape: f32[1,2], index: 5, kind: output, shape index: {}]
  %s6 = sld [smem:[#allocation0]]
  $region54: #{tpu_custom_call.1} parent=0
    _
  %s8 = ssub.s32 1, %s6
  %s9 = scalar_select 0, %s8, %s6
  $region1: #{tpu_custom_call.1} parent=0
    #allocation2 [shape = 'u8[4096]{0}', space=vmem, size = 0x1000, scoped, tag = 'input window, operand 0, single buffered']
    #allocation3 [shape = 's32[1]{0}', space=sflag, size = 0x4, scoped, tag = 'scoped memory for tpu_custom_call.1']
    #allocation4 [shape = 's32[1]{0}', space=sflag, size = 0x4, scoped, tag = 'scoped memory for tpu_custom_call.1']
    #allocation5 [shape = 'u8[2048]{0}', space=vmem, size = 0x800, scoped, tag = 'input window, operand 1, single buffered']
    #allocation6 [shape = 's32[1]{0}', space=sflag, size = 0x4, scoped, tag = 'scoped memory for tpu_custom_call.1']
    #allocation7 [shape = 'u8[2048]{0}', space=vmem, size = 0x800, scoped, tag = 'input window, operand 2, single buffered']
    #allocation8 [shape = 'u8[2048]{0}', space=vmem, size = 0x800, scoped, tag = 'input window, operand 3, single buffered']
    #allocation9 [shape = 's32[1]{0}', space=sflag, size = 0x4, scoped, tag = 'scoped memory for tpu_custom_call.1']
    #allocation10 [shape = 'u8[2048]{0}', space=vmem, size = 0x800, scoped, tag = 'input window, operand 4, single buffered']
    #allocation11 [shape = 'u8[512]{0}', space=smem, size = 0x200, scoped, tag = 'output window, operand 0, single buffered']
    %10 = vsyncpa [#allocation3], 0
    %11 = vsyncpa [#allocation6], 0
    %12 = vsyncpa [#allocation9], 0
    %13 = vsyncpa [#allocation4], 0
    // Predicated region
    $region2: #{tpu_custom_call.1} parent=1 // pred_check
      _
    $region3: #{tpu_custom_call.1} parent=1 // pred_check_branch
      %15 = sbr.rel (0) target = $region5
    $region4: #{tpu_custom_call.1} parent=1 // pred_region
      %s17 = ssub.s32 128, 128
      %18 = vsyncadd [#allocation3], %s17
      %s20 = sshll.u32 [#allocation2], 4
      %s21 = int_to_ptr.vmem [resolvable:$true] %s20
      %23 = dma.hbm_to_vmem [thread:$0]  %s0, 128, %s21, [#allocation3]
    $region5: #{tpu_custom_call.1} parent=1 // pred_fallthru
      _
    // Predicated region
    $region6: #{tpu_custom_call.1} parent=1 // pred_check
      _
    $region7: #{tpu_custom_call.1} parent=1 // pred_check_branch
      %25 = sbr.rel (0) target = $region9
    $region8: #{tpu_custom_call.1} parent=1 // pred_region
      %s27 = ssub.s32 64, 64
      %28 = vsyncadd [#allocation6], %s27
      %s30 = sshll.u32 [#allocation5], 4
      %s31 = int_to_ptr.vmem [resolvable:$true] %s30
      %33 = dma.hbm_to_vmem [thread:$0]  %s1, 64, %s31, [#allocation6]
    $region9: #{tpu_custom_call.1} parent=1 // pred_fallthru
      _
    // Predicated region
    $region10: #{tpu_custom_call.1} parent=1 // pred_check
      _
    $region11: #{tpu_custom_call.1} parent=1 // pred_check_branch
      %35 = sbr.rel (0) target = $region13
    $region12: #{tpu_custom_call.1} parent=1 // pred_region
      %s37 = ssub.s32 64, 64
      %38 = vsyncadd [#allocation6], %s37
      %s40 = sshll.u32 [#allocation7], 4
      %s41 = int_to_ptr.vmem [resolvable:$true] %s40
      %43 = dma.hbm_to_vmem [thread:$0]  %s2, 64, %s41, [#allocation6]
    $region13: #{tpu_custom_call.1} parent=1 // pred_fallthru
      _
    // Predicated region
    $region14: #{tpu_custom_call.1} parent=1 // pred_check
      _
    $region15: #{tpu_custom_call.1} parent=1 // pred_check_branch
      %45 = sbr.rel (0) target = $region17
    $region16: #{tpu_custom_call.1} parent=1 // pred_region
      %s47 = ssub.s32 64, 64
      %48 = vsyncadd [#allocation9], %s47
      %s50 = sshll.u32 [#allocation8], 4
      %s51 = int_to_ptr.vmem [resolvable:$true] %s50
      %53 = dma.hbm_to_vmem [thread:$0]  %s3, 64, %s51, [#allocation9]
    $region17: #{tpu_custom_call.1} parent=1 // pred_fallthru
      _
    // Predicated region
    $region18: #{tpu_custom_call.1} parent=1 // pred_check
      _
    $region19: #{tpu_custom_call.1} parent=1 // pred_check_branch
      %55 = sbr.rel (0) target = $region21
    $region20: #{tpu_custom_call.1} parent=1 // pred_region
      %s57 = ssub.s32 64, 64
      %58 = vsyncadd [#allocation9], %s57
      %s60 = sshll.u32 [#allocation10], 4
      %s61 = int_to_ptr.vmem [resolvable:$true] %s60
      %63 = dma.hbm_to_vmem [thread:$0]  %s4, 64, %s61, [#allocation9]
    $region21: #{tpu_custom_call.1} parent=1 // pred_fallthru
      _
    // Predicated region
    $region22: #{tpu_custom_call.1} parent=1 // pred_check
      _
    $region23: #{tpu_custom_call.1} parent=1 // pred_check_branch
      %65 = sbr.rel (0) target = $region25
    $region24: #{tpu_custom_call.1} parent=1 // pred_region
      %66 = dma.done [#allocation3], 128
    $region25: #{tpu_custom_call.1} parent=1 // pred_fallthru
      _
    // Predicated region
    $region26: #{tpu_custom_call.1} parent=1 // pred_check
      _
    $region27: #{tpu_custom_call.1} parent=1 // pred_check_branch
      %68 = sbr.rel (0) target = $region29
    $region28: #{tpu_custom_call.1} parent=1 // pred_region
      %69 = dma.done [#allocation6], 64
    $region29: #{tpu_custom_call.1} parent=1 // pred_fallthru
      _
    // Predicated region
    $region30: #{tpu_custom_call.1} parent=1 // pred_check
      _
    $region31: #{tpu_custom_call.1} parent=1 // pred_check_branch
      %71 = sbr.rel (0) target = $region33
    $region32: #{tpu_custom_call.1} parent=1 // pred_region
      %72 = dma.done [#allocation6], 64
    $region33: #{tpu_custom_call.1} parent=1 // pred_fallthru
      _
    // Predicated region
    $region34: #{tpu_custom_call.1} parent=1 // pred_check
      _
    $region35: #{tpu_custom_call.1} parent=1 // pred_check_branch
      %74 = sbr.rel (0) target = $region37
    $region36: #{tpu_custom_call.1} parent=1 // pred_region
      %75 = dma.done [#allocation9], 64
    $region37: #{tpu_custom_call.1} parent=1 // pred_fallthru
      _
    // Predicated region
    $region38: #{tpu_custom_call.1} parent=1 // pred_check
      _
    $region39: #{tpu_custom_call.1} parent=1 // pred_check_branch
      %77 = sbr.rel (0) target = $region41
    $region40: #{tpu_custom_call.1} parent=1 // pred_region
      %78 = dma.done [#allocation9], 64
    $region41: #{tpu_custom_call.1} parent=1 // pred_fallthru
      _
    %p79 = scmp.eq.s32.totalorder 0, 0
    // Predicated region
    $region42: #{tpu_custom_call.1} parent=1 // pred_check
      %p80 = pneg %p79
    $region43: #{tpu_custom_call.1} parent=1 // pred_check_branch
      %82 = sbr.rel (%p80) target = $region45
    $region44: #{tpu_custom_call.1} parent=1 // pred_region
      %v83 = vld [vmem:[#allocation2] sm:$0x3f]
      %v84 = vsub.f32 1.0, %v83
      %v85 = vmax.f32 %v84, 0.0
      %vm86 = vcmask 122880
      %v87 = vsel %vm86, %v85, 0.0
      %88 = vadd.xlane.f32.xlu0 %v87
      %v89 = vpop.xlane.xlu0 %88
      %v90 = vrot.slane %v89, 4
      %v91 = vadd.f32 %v89, %v90
      %v92 = vrot.slane %v91, 2
      %v93 = vadd.f32 %v91, %v92
      %v94 = vrot.slane %v93, 1
      %v95 = vadd.f32 %v93, %v94
      %s96 = vtos %v95
      %v97 = vsub.f32 %v83, 2.5
      %v98 = vmax.f32 %v97, 0.0
      %v99 = vsel %vm86, %v98, 0.0
      %100 = vadd.xlane.f32.xlu0 %v99
      %v101 = vpop.xlane.xlu0 %100
      %v102 = vrot.slane %v101, 4
      %v103 = vadd.f32 %v101, %v102
      %v104 = vrot.slane %v103, 2
      %v105 = vadd.f32 %v103, %v104
      %v106 = vrot.slane %v105, 1
      %v107 = vadd.f32 %v105, %v106
      %s108 = vtos %v107
      %s109 = sadd.f32 %s96, %s108
      %v110 = vsub.f32 0.0, %v83
      %v111 = vmax.f32 %v110, 0.0
      %v113 = vrot.slane %v111, 1
      %v115 = vsel %vm86, %v113, 0.0
      %116 = vadd.xlane.f32.xlu0 %v115
      %v117 = vpop.xlane.xlu0 %116
      %v118 = vrot.slane %v117, 4
      %v119 = vadd.f32 %v117, %v118
      %v120 = vrot.slane %v119, 2
      %v121 = vadd.f32 %v119, %v120
      %v122 = vrot.slane %v121, 1
      %v123 = vadd.f32 %v121, %v122
      %s124 = vtos %v123
      %s125 = sadd.f32 %s109, %s124
      %v126 = vrot.slane %v111, 2
      %v128 = vsel %vm86, %v126, 0.0
      %129 = vadd.xlane.f32.xlu0 %v128
      %v130 = vpop.xlane.xlu0 %129
      %v131 = vrot.slane %v130, 4
      %v132 = vadd.f32 %v130, %v131
      %v133 = vrot.slane %v132, 2
      %v134 = vadd.f32 %v132, %v133
      %v135 = vrot.slane %v134, 1
      %v136 = vadd.f32 %v134, %v135
      %s137 = vtos %v136
      %s138 = sadd.f32 %s125, %s137
      %v139 = vrot.slane %v111, 3
      %v141 = vsel %vm86, %v139, 0.0
      %142 = vadd.xlane.f32.xlu0 %v141
      %v143 = vpop.xlane.xlu0 %142
      %v144 = vrot.slane %v143, 4
      %v145 = vadd.f32 %v143, %v144
      %v146 = vrot.slane %v145, 2
      %v147 = vadd.f32 %v145, %v146
      %v148 = vrot.slane %v147, 1
      %v149 = vadd.f32 %v147, %v148
      %s150 = vtos %v149
      %s151 = sadd.f32 %s138, %s150
      %v152 = vsub.f32 0.004, %v83
      %v153 = vmax.f32 %v152, 0.0
      %v155 = vrot.slane %v153, 4
      %v157 = vsel %vm86, %v155, 0.0
      %158 = vadd.xlane.f32.xlu0 %v157
      %v159 = vpop.xlane.xlu0 %158
      %v160 = vrot.slane %v159, 4
      %v161 = vadd.f32 %v159, %v160
      %v162 = vrot.slane %v161, 2
      %v163 = vadd.f32 %v161, %v162
      %v164 = vrot.slane %v163, 1
      %v165 = vadd.f32 %v163, %v164
      %s166 = vtos %v165
      %s167 = sadd.f32 %s151, %s166
      %v168 = vsub.f32 %v83, 0.04
      %v169 = vmax.f32 %v168, 0.0
      %v171 = vrot.slane %v169, 4
      %v173 = vsel %vm86, %v171, 0.0
      %174 = vadd.xlane.f32.xlu0 %v173
      %v175 = vpop.xlane.xlu0 %174
      %v176 = vrot.slane %v175, 4
      %v177 = vadd.f32 %v175, %v176
      %v178 = vrot.slane %v177, 2
      %v179 = vadd.f32 %v177, %v178
      %v180 = vrot.slane %v179, 1
      %v181 = vadd.f32 %v179, %v180
      %s182 = vtos %v181
      %s183 = sadd.f32 %s167, %s182
      %v184 = vsub.f32 0.0015, %v83
      %v185 = vmax.f32 %v184, 0.0
      %v187 = vrot.slane %v185, 5
      %v189 = vsel %vm86, %v187, 0.0
      %190 = vadd.xlane.f32.xlu0 %v189
      %v191 = vpop.xlane.xlu0 %190
      %v192 = vrot.slane %v191, 4
      %v193 = vadd.f32 %v191, %v192
      %v194 = vrot.slane %v193, 2
      %v195 = vadd.f32 %v193, %v194
      %v196 = vrot.slane %v195, 1
      %v197 = vadd.f32 %v195, %v196
      %s198 = vtos %v197
      %s199 = sadd.f32 %s183, %s198
      %v200 = vrot.slane %v169, 5
      %v202 = vsel %vm86, %v200, 0.0
      %203 = vadd.xlane.f32.xlu0 %v202
      %v204 = vpop.xlane.xlu0 %203
      %v205 = vrot.slane %v204, 4
      %v206 = vadd.f32 %v204, %v205
      %v207 = vrot.slane %v206, 2
      %v208 = vadd.f32 %v206, %v207
      %v209 = vrot.slane %v208, 1
      %v210 = vadd.f32 %v208, %v209
      %s211 = vtos %v210
      %s212 = sadd.f32 %s199, %s211
      %v214 = vrot.slane %v83, 2
      %v216 = vsel %vm86, %v214, 0.0
      %217 = vadd.xlane.f32.xlu0 %v216
      %v218 = vpop.xlane.xlu0 %217
      %v219 = vrot.slane %v218, 4
      %v220 = vadd.f32 %v218, %v219
      %v221 = vrot.slane %v220, 2
      %v222 = vadd.f32 %v220, %v221
      %v223 = vrot.slane %v222, 1
      %v224 = vadd.f32 %v222, %v223
      %s225 = vtos %v224
      %v226 = vrcp.pop 16.0
      %s227 = vtos %v226
      %s228 = smul.f32 %s225, %s227
      %v229 = vstv %s228
      %v230 = vsub.f32 %v83, %v229
      %v231 = vrot.slane %v83, 1
      %v233 = vsel %vm86, %v231, 0.0
      %234 = vadd.xlane.f32.xlu0 %v233
      %v235 = vpop.xlane.xlu0 %234
      %v236 = vrot.slane %v235, 4
      %v237 = vadd.f32 %v235, %v236
      %v238 = vrot.slane %v237, 2
      %v239 = vadd.f32 %v237, %v238
      %v240 = vrot.slane %v239, 1
      %v241 = vadd.f32 %v239, %v240
      %s242 = vtos %v241
      %v243 = vrcp.pop 16.0
      %s244 = vtos %v243
      %s245 = smul.f32 %s242, %s244
      %v246 = vstv %s245
      %v247 = vsub.f32 %v83, %v246
      %v249 = vrot.slane %v247, 7
      %v251 = vmul.f32 %v230, %v249
      %v253 = vrot.slane %v251, 2
      %v255 = vsel %vm86, %v253, 0.0
      %256 = vadd.xlane.f32.xlu0 %v255
      %v257 = vpop.xlane.xlu0 %256
      %v258 = vrot.slane %v257, 4
      %v259 = vadd.f32 %v257, %v258
      %v260 = vrot.slane %v259, 2
      %v261 = vadd.f32 %v259, %v260
      %v262 = vrot.slane %v261, 1
      %v263 = vadd.f32 %v261, %v262
      %s264 = vtos %v263
      %v265 = vmul.f32 %v230, %v230
      %v267 = vrot.slane %v265, 2
      %v269 = vsel %vm86, %v267, 0.0
      %270 = vadd.xlane.f32.xlu0 %v269
      %v271 = vpop.xlane.xlu0 %270
      %v272 = vrot.slane %v271, 4
      %v273 = vadd.f32 %v271, %v272
      %v274 = vrot.slane %v273, 2
      %v275 = vadd.f32 %v273, %v274
      %v276 = vrot.slane %v275, 1
      %v277 = vadd.f32 %v275, %v276
      %s278 = vtos %v277
      %v279 = vmul.f32 %v247, %v247
      %v281 = vrot.slane %v279, 1
      %v283 = vsel %vm86, %v281, 0.0
      %284 = vadd.xlane.f32.xlu0 %v283
      %v285 = vpop.xlane.xlu0 %284
      %v286 = vrot.slane %v285, 4
      %v287 = vadd.f32 %v285, %v286
      %v288 = vrot.slane %v287, 2
      %v289 = vadd.f32 %v287, %v288
      %v290 = vrot.slane %v289, 1
      %v291 = vadd.f32 %v289, %v290
      %s292 = vtos %v291
      %s293 = smul.f32 %s278, %s292
      %v294 = vstv %s293
      %v295 = vrsqrt.pop %v294
      %s296 = vtos %v295
      %s297 = smul.f32 %s264, %s296
      %p298 = scmp.ne.f32.partialorder %s297, %s297
      %s299 = scalar_select %p298, 0.0, %s297
      %s300 = smin.f32 %s299, 0.9
      %s301 = ssub.f32 0.9, %s300
      %s302 = sadd.f32 %s212, %s301
      %v303 = vrot.slane %v83, 4
      %v305 = vsel %vm86, %v303, 0.0
      %306 = vadd.xlane.f32.xlu0 %v305
      %v307 = vpop.xlane.xlu0 %306
      %v308 = vrot.slane %v307, 4
      %v309 = vadd.f32 %v307, %v308
      %v310 = vrot.slane %v309, 2
      %v311 = vadd.f32 %v309, %v310
      %v312 = vrot.slane %v311, 1
      %v313 = vadd.f32 %v311, %v312
      %s314 = vtos %v313
      %v315 = vrcp.pop 16.0
      %s316 = vtos %v315
      %s317 = smul.f32 %s314, %s316
      %v318 = vstv %s317
      %v319 = vsub.f32 %v83, %v318
      %v320 = vrot.slane %v83, 5
      %v322 = vsel %vm86, %v320, 0.0
      %323 = vadd.xlane.f32.xlu0 %v322
      %v324 = vpop.xlane.xlu0 %323
      %v325 = vrot.slane %v324, 4
      %v326 = vadd.f32 %v324, %v325
      %v327 = vrot.slane %v326, 2
      %v328 = vadd.f32 %v326, %v327
      %v329 = vrot.slane %v328, 1
      %v330 = vadd.f32 %v328, %v329
      %s331 = vtos %v330
      %v332 = vrcp.pop 16.0
      %s333 = vtos %v332
      %s334 = smul.f32 %s331, %s333
      %v335 = vstv %s334
      %v336 = vsub.f32 %v83, %v335
      %v338 = vrot.slane %v336, 1
      %v340 = vmul.f32 %v319, %v338
      %v342 = vrot.slane %v340, 4
      %v344 = vsel %vm86, %v342, 0.0
      %345 = vadd.xlane.f32.xlu0 %v344
      %v346 = vpop.xlane.xlu0 %345
      %v347 = vrot.slane %v346, 4
      %v348 = vadd.f32 %v346, %v347
      %v349 = vrot.slane %v348, 2
      %v350 = vadd.f32 %v348, %v349
      %v351 = vrot.slane %v350, 1
      %v352 = vadd.f32 %v350, %v351
      %s353 = vtos %v352
      %v354 = vmul.f32 %v319, %v319
      %v356 = vrot.slane %v354, 4
      %v358 = vsel %vm86, %v356, 0.0
      %359 = vadd.xlane.f32.xlu0 %v358
      %v360 = vpop.xlane.xlu0 %359
      %v361 = vrot.slane %v360, 4
      %v362 = vadd.f32 %v360, %v361
      %v363 = vrot.slane %v362, 2
      %v364 = vadd.f32 %v362, %v363
      %v365 = vrot.slane %v364, 1
      %v366 = vadd.f32 %v364, %v365
      %s367 = vtos %v366
      %v368 = vmul.f32 %v336, %v336
      %v370 = vrot.slane %v368, 5
      %v372 = vsel %vm86, %v370, 0.0
      %373 = vadd.xlane.f32.xlu0 %v372
      %v374 = vpop.xlane.xlu0 %373
      %v375 = vrot.slane %v374, 4
      %v376 = vadd.f32 %v374, %v375
      %v377 = vrot.slane %v376, 2
      %v378 = vadd.f32 %v376, %v377
      %v379 = vrot.slane %v378, 1
      %v380 = vadd.f32 %v378, %v379
      %s381 = vtos %v380
      %s382 = smul.f32 %s367, %s381
      %v383 = vstv %s382
      %v384 = vrsqrt.pop %v383
      %s385 = vtos %v384
      %s386 = smul.f32 %s353, %s385
      %p387 = scmp.ne.f32.partialorder %s386, %s386
      %s388 = scalar_select %p387, 0.0, %s386
      %s389 = smin.f32 %s388, 0.6
      %s390 = ssub.f32 0.6, %s389
      %s391 = sadd.f32 %s302, %s390
      %s392 = scalar_lea.smem [#allocation11], 0
      %393 = sst [smem:[%s392]] %s391
      %s394 = scalar_lea.smem [#allocation11], 1
      %395 = sst [smem:[%s394]] 0.0
    $region45: #{tpu_custom_call.1} parent=1 // pred_fallthru
      _
    %v396 = vlaneseq
    %v397 = vand.u32 %v396, 127
    %vm398 = vcmp.lt.s32.totalorder %v397, 106
    %v399 = vld [vmem:[#allocation5] sm:$0xf]
    %v400 = vld [vmem:[#allocation7] sm:$0xf]
    %v401 = vsub.f32 %v399, %v400
    %v402 = vsel %vm398, %v401, 0.0
    %v403 = vmul.f32 %v402, %v402
    %vm404 = vcmask 1043456
    %v405 = vsel %vm404, %v403, 0.0
    %406 = vadd.xlane.f32.xlu0 %v405
    %v407 = vpop.xlane.xlu0 %406
    %v408 = vrot.slane %v407, 4
    %v409 = vadd.f32 %v407, %v408
    %v410 = vrot.slane %v409, 2
    %v411 = vadd.f32 %v409, %v410
    %v412 = vrot.slane %v411, 1
    %v413 = vadd.f32 %v411, %v412
    %s414 = vtos %v413
    %v415 = vld [vmem:[#allocation8] sm:$0xf]
    %v416 = vld [vmem:[#allocation10] sm:$0xf]
    %v417 = vsub.f32 %v415, %v416
    %v418 = vsel %vm398, %v417, 0.0
    %v419 = vmul.f32 %v418, %v418
    %v420 = vsel %vm404, %v419, 0.0
    %421 = vadd.xlane.f32.xlu0 %v420
    %v422 = vpop.xlane.xlu0 %421
    %v423 = vrot.slane %v422, 4
    %v424 = vadd.f32 %v422, %v423
    %v425 = vrot.slane %v424, 2
    %v426 = vadd.f32 %v424, %v425
    %v427 = vrot.slane %v426, 1
    %v428 = vadd.f32 %v426, %v427
    %s429 = vtos %v428
    %s430 = sadd.f32 %s414, %s429
    %s431 = sld [smem:[#allocation11 + $0x1]]
    %s432 = sadd.f32 %s431, %s430
    %s433 = scalar_lea.smem [#allocation11], 1
    %434 = sst [smem:[%s433]] %s432
    // Predicated region
    $region46: #{tpu_custom_call.1} parent=1 // pred_check
      _
    $region47: #{tpu_custom_call.1} parent=1 // pred_check_branch
      %436 = sbr.rel (0) target = $region49
    $region48: #{tpu_custom_call.1} parent=1 // pred_region
      %s438 = ssub.s32 16, 16
      %439 = vsyncadd [#allocation4], %s438
      %442 = dma.smem_to_hbm [#allocation11], 16, %s5, [#allocation4]
    $region49: #{tpu_custom_call.1} parent=1 // pred_fallthru
      _
    // Predicated region
    $region50: #{tpu_custom_call.1} parent=1 // pred_check
      _
    $region51: #{tpu_custom_call.1} parent=1 // pred_check_branch
      %444 = sbr.rel (0) target = $region53
    $region52: #{tpu_custom_call.1} parent=1 // pred_region
      %445 = dma.done [#allocation4], 16
    $region53: #{tpu_custom_call.1} parent=1 // pred_fallthru
      _
    %446 = sfence
    %447 = vsyncpa [#allocation3], 1
    %448 = vsyncpa [#allocation6], 1
    %449 = vsyncpa [#allocation9], 1
    %450 = vsyncpa [#allocation4], 1

</llo_original>
